<compile_context>
chip_gen: v7x
topology: tpu7x:2x2x1
jax: 0.10.0
libtpu: 0.0.40
codegen_flags: <defaults>
</compile_context>

<pallas_src>
import functools

import jax
import jax.numpy as jnp
from jax.experimental import pallas as pl
from jax.experimental.pallas import tpu as pltpu

BLOCK_SIZE = 5
P = 0.1


# --------------------------------------------------------------------------- #
# In-kernel helpers                                                            #
# --------------------------------------------------------------------------- #
def _pool_keep(centers_f32, w, hw, pad):
    """keep = 1 - maxpool_{bs x bs, stride 1, SAME}(centers), separable form.

    centers_f32: (cb, H*W) float32 in {0,1}, zero on the pad-wide border of
    every (H, W) plane, so circular rolls == zero-padded shifts.
    """
    t = centers_f32
    for d in range(1, pad + 1):                       # W direction: 2*pad maxima
        t = jnp.maximum(t, jnp.roll(centers_f32, d, axis=1))
        t = jnp.maximum(t, jnp.roll(centers_f32, -d, axis=1))
    pooled = t
    for d in range(1, pad + 1):                       # H direction: 2*pad maxima
        pooled = jnp.maximum(pooled, jnp.roll(t, d * w, axis=1))
        pooled = jnp.maximum(pooled, jnp.roll(t, -d * w, axis=1))
    return 1.0 - pooled


# Pass 1: pool the drop centers once, emit int8 keep + per-tile lane partial sums.
def _mask_kernel(centers_ref, keep_ref, psum_ref, *, w, hw, pad):
    keep = _pool_keep(centers_ref[0].astype(jnp.float32), w, hw, pad)
    keep_ref[0] = keep.astype(jnp.int8)
    # Sublane-only partial sum; the tiny final reduction happens on the host.
    psum_ref[...] = jnp.sum(keep, axis=0, keepdims=True).reshape(1, 1, 1, hw)


# Pass 2: out = keep * x * scale (streaming pass, near HBM roofline).
def _apply_kernel(scale_ref, keep_ref, x_ref, o_ref):
    scale = scale_ref[0]
    o_ref[0] = (keep_ref[0].astype(jnp.float32)
                * x_ref[0].astype(jnp.float32) * scale).astype(o_ref.dtype)


# --------------------------------------------------------------------------- #
# Wrapper                                                                      #
# --------------------------------------------------------------------------- #
def _pick_channels_per_step(n, c, hw, x_itemsize, budget_bytes=8 << 20):
    """Largest channel chunk that divides C, is layout-friendly, fits the VMEM
    budget (including f32 pool temporaries), and leaves >= 2 grid steps."""
    # Per-element cost of one grid step:
    #   x + out blocks, double-buffered          : 2 * 2 * itemsize
    #   int8 centers + keep blocks, double-buf.  : 2 * 2 * 1
    #   ~4 live f32 pool temporaries             : 4 * 4
    per_elem = 4 * x_itemsize + 4 + 16
    divisors = [d for d in range(1, c + 1) if c % d == 0]
    fit = [d for d in divisors if d * hw * per_elem <= budget_bytes]
    aligned = [d for d in fit if d % 32 == 0 or d == c] or fit or [1]
    cb = max(aligned)
    if n * (c // cb) < 2:                       # megacore: give both TCs work
        smaller = [d for d in aligned if n * (c // d) >= 2]
        if smaller:
            cb = max(smaller)
    return cb


def dropblock(x, key, *, block_size=BLOCK_SIZE, p=P, training=True,
              channels_per_step=None, return_centers=False):
    """Forward pass matching DropBlock.forward (training branch)."""
    if not training:
        return (x, None) if return_centers else x
    if block_size % 2 != 1:
        raise ValueError("block_size must be odd (module default is 5).")

    N, C, H, W = x.shape
    pad = block_size // 2
    HW = H * W
    # TODO(synk): for feature maps where H*W is not a multiple of 128 the full-
    # extent lane-dense blocks still lower correctly but with masked stores;
    # pad W into the zero border for peak throughput on such shapes.

    # gamma = (1 - p)/bs^2 * W^2/(W - bs + 1)^2  (PyTorch uses x.shape[-1] == W)
    gamma = (1.0 - p) / (block_size ** 2) * (W ** 2) / ((W - block_size + 1) ** 2)

    # Drop centers: Bernoulli(gamma) on the valid-center field, zero-padded to
    # (H, W) — the torch.bernoulli(...) + F.pad(...) tensor of the module.
    mask_shape = (N, C, H - block_size + 1, W - block_size + 1)
    centers4d = jnp.pad(
        jax.random.bernoulli(key, gamma, mask_shape),
        ((0, 0), (0, 0), (pad, pad), (pad, pad))).astype(jnp.float32)
    centers_i8 = centers4d.astype(jnp.int8).reshape(N, C, HW)

    cb = channels_per_step or _pick_channels_per_step(N, C, HW, x.dtype.itemsize)
    if C % cb != 0:
        raise ValueError("channels_per_step must divide C")
    ct = C // cb
    grid = (N, ct)

    tile_spec = pl.BlockSpec((1, cb, HW), lambda i, j: (i, j, 0))
    psum_spec = pl.BlockSpec((1, 1, 1, HW), lambda i, j: (i, j, 0, 0))
    smem_spec = pl.BlockSpec(memory_space=pltpu.MemorySpace.SMEM)
    cparams = pltpu.CompilerParams(
        dimension_semantics=("parallel", "parallel"),
        vmem_limit_bytes=32 * 1024 * 1024)

    # ---- pass 1: keep = 1 - maxpool(centers) as int8, + lane partial sums --- #
    keep_i8, psum = pl.pallas_call(
        functools.partial(_mask_kernel, w=W, hw=HW, pad=pad),
        out_shape=(jax.ShapeDtypeStruct((N, C, HW), jnp.int8),
                   jax.ShapeDtypeStruct((N, ct, 1, HW), jnp.float32)),
        grid=grid,
        in_specs=[tile_spec],
        out_specs=(tile_spec, psum_spec),
        compiler_params=cparams,
    )(centers_i8)

    total = jnp.sum(psum, dtype=jnp.float32)
    numel = jnp.float32(N * C * H * W)
    # PyTorch would emit inf/NaN if every position were dropped; guard it.
    scale = jnp.where(total > 0.0, numel / total, jnp.float32(1.0)).reshape(1)

    # ---- pass 2: out = keep * x * scale ------------------------------------ #
    xr = x.reshape(N, C, HW)
    out = pl.pallas_call(
        _apply_kernel,
        out_shape=jax.ShapeDtypeStruct((N, C, HW), x.dtype),
        grid=grid,
        in_specs=[smem_spec, tile_spec, tile_spec],
        out_specs=tile_spec,
        compiler_params=cparams,
    )(scale, keep_i8, xr).reshape(N, C, H, W)

    if return_centers:
        return out, centers4d
    return out


if __name__ == "__main__":
    root = jax.random.PRNGKey(0)
    kx, kmask = jax.random.split(root)
    N, C, H, W = 2, 4, 16, 16
    x = jax.random.normal(kx, (N, C, H, W), dtype=jnp.float32)

    out, centers = dropblock(x, kmask, block_size=BLOCK_SIZE, p=P,
                             training=True, return_centers=True)
    out = jax.block_until_ready(out)

    # Pure-JAX reference reproducing the PyTorch math on the exact sampled
    # centers (SAME max-pool == pad + pool composition for odd block_size).
    pooled = jax.lax.reduce_window(
        centers, -jnp.inf, jax.lax.max,
        (1, 1, BLOCK_SIZE, BLOCK_SIZE), (1, 1, 1, 1), "SAME")
    keep = 1.0 - pooled
    ref = keep * x * (keep.size / jnp.sum(keep))
    assert jnp.allclose(out, ref, atol=1e-5, rtol=1e-5), "mismatch vs reference"

    # Structural sanity: binary center field with a zero border of width bs//2.
    pad = BLOCK_SIZE // 2
    assert bool(jnp.all((centers == 0.0) | (centers == 1.0)))
    border_mass = jnp.sum(centers) - jnp.sum(centers[:, :, pad:H - pad, pad:W - pad])
    assert float(border_mass) == 0.0

    # Eval-mode path is identity.
    out_eval = dropblock(x, kmask, training=False)
    assert jnp.array_equal(out_eval, x)

    print("KERNEL_OK")
</pallas_src>

<mosaic_0001>
module attributes {stable_mosaic.version = 11 : i64} {
  func.func @_mask_kernel(%arg0: i32, %arg1: i32, %arg2: memref<1x4x256xi8, #tpu.memory_space<vmem>>, %arg3: memref<1x4x256xi8, #tpu.memory_space<vmem>>, %arg4: memref<1x1x1x256xf32, #tpu.memory_space<vmem>>) attributes {dimension_semantics = [#tpu.dimension_semantics<parallel>, #tpu.dimension_semantics<parallel>], iteration_bounds = array<i64: 2, 1>, scalar_prefetch = 0 : i64, scratch_operands = 0 : i64, tpu.core_type = #tpu.core_type<tc>, window_params = [{transform_indices = @transform_0, window_bounds = array<i64: 1, 4, 256>}, {transform_indices = @transform_1, window_bounds = array<i64: 1, 4, 256>}, {transform_indices = @transform_2, window_bounds = array<i64: 1, 1, 1, 256>}]} {
    %c0 = arith.constant 0 : index
    %c0_0 = arith.constant 0 : index
    %c0_1 = arith.constant 0 : index
    %0 = vector.load %arg2[%c0, %c0_0, %c0_1] : memref<1x4x256xi8, #tpu.memory_space<vmem>>, vector<1x4x256xi8>
    %1 = vector.shape_cast %0 : vector<1x4x256xi8> to vector<4x256xi8>
    %2 = arith.sitofp %1 : vector<4x256xi8> to vector<4x256xf32>
    %3 = vector.extract_strided_slice %2 {offsets = [0, 255], sizes = [4, 1], strides = [1, 1]} : vector<4x256xf32> to vector<4x1xf32>
    %4 = vector.extract_strided_slice %2 {offsets = [0, 0], sizes = [4, 255], strides = [1, 1]} : vector<4x256xf32> to vector<4x255xf32>
    %5 = tpu.concatenate %3, %4 in 1 : vector<4x1xf32>, vector<4x255xf32> -> vector<4x256xf32>
    %6 = arith.maximumf %2, %5 : vector<4x256xf32>
    %7 = vector.extract_strided_slice %2 {offsets = [0, 1], sizes = [4, 255], strides = [1, 1]} : vector<4x256xf32> to vector<4x255xf32>
    %8 = vector.extract_strided_slice %2 {offsets = [0, 0], sizes = [4, 1], strides = [1, 1]} : vector<4x256xf32> to vector<4x1xf32>
    %9 = tpu.concatenate %7, %8 in 1 : vector<4x255xf32>, vector<4x1xf32> -> vector<4x256xf32>
    %10 = arith.maximumf %6, %9 : vector<4x256xf32>
    %11 = vector.extract_strided_slice %2 {offsets = [0, 254], sizes = [4, 2], strides = [1, 1]} : vector<4x256xf32> to vector<4x2xf32>
    %12 = vector.extract_strided_slice %2 {offsets = [0, 0], sizes = [4, 254], strides = [1, 1]} : vector<4x256xf32> to vector<4x254xf32>
    %13 = tpu.concatenate %11, %12 in 1 : vector<4x2xf32>, vector<4x254xf32> -> vector<4x256xf32>
    %14 = arith.maximumf %10, %13 : vector<4x256xf32>
    %15 = vector.extract_strided_slice %2 {offsets = [0, 2], sizes = [4, 254], strides = [1, 1]} : vector<4x256xf32> to vector<4x254xf32>
    %16 = vector.extract_strided_slice %2 {offsets = [0, 0], sizes = [4, 2], strides = [1, 1]} : vector<4x256xf32> to vector<4x2xf32>
    %17 = tpu.concatenate %15, %16 in 1 : vector<4x254xf32>, vector<4x2xf32> -> vector<4x256xf32>
    %18 = arith.maximumf %14, %17 : vector<4x256xf32>
    %19 = vector.extract_strided_slice %18 {offsets = [0, 240], sizes = [4, 16], strides = [1, 1]} : vector<4x256xf32> to vector<4x16xf32>
    %20 = vector.extract_strided_slice %18 {offsets = [0, 0], sizes = [4, 240], strides = [1, 1]} : vector<4x256xf32> to vector<4x240xf32>
    %21 = tpu.concatenate %19, %20 in 1 : vector<4x16xf32>, vector<4x240xf32> -> vector<4x256xf32>
    %22 = arith.maximumf %18, %21 : vector<4x256xf32>
    %23 = vector.extract_strided_slice %18 {offsets = [0, 16], sizes = [4, 240], strides = [1, 1]} : vector<4x256xf32> to vector<4x240xf32>
    %24 = vector.extract_strided_slice %18 {offsets = [0, 0], sizes = [4, 16], strides = [1, 1]} : vector<4x256xf32> to vector<4x16xf32>
    %25 = tpu.concatenate %23, %24 in 1 : vector<4x240xf32>, vector<4x16xf32> -> vector<4x256xf32>
    %26 = arith.maximumf %22, %25 : vector<4x256xf32>
    %27 = vector.extract_strided_slice %18 {offsets = [0, 224], sizes = [4, 32], strides = [1, 1]} : vector<4x256xf32> to vector<4x32xf32>
    %28 = vector.extract_strided_slice %18 {offsets = [0, 0], sizes = [4, 224], strides = [1, 1]} : vector<4x256xf32> to vector<4x224xf32>
    %29 = tpu.concatenate %27, %28 in 1 : vector<4x32xf32>, vector<4x224xf32> -> vector<4x256xf32>
    %30 = arith.maximumf %26, %29 : vector<4x256xf32>
    %31 = vector.extract_strided_slice %18 {offsets = [0, 32], sizes = [4, 224], strides = [1, 1]} : vector<4x256xf32> to vector<4x224xf32>
    %32 = vector.extract_strided_slice %18 {offsets = [0, 0], sizes = [4, 32], strides = [1, 1]} : vector<4x256xf32> to vector<4x32xf32>
    %33 = tpu.concatenate %31, %32 in 1 : vector<4x224xf32>, vector<4x32xf32> -> vector<4x256xf32>
    %34 = arith.maximumf %30, %33 : vector<4x256xf32>
    %cst = arith.constant 1.000000e+00 : f32
    %35 = vector.broadcast %cst : f32 to vector<4x256xf32>
    %36 = arith.subf %35, %34 : vector<4x256xf32>
    %37 = arith.fptosi %36 : vector<4x256xf32> to vector<4x256xi8>
    %c0_2 = arith.constant 0 : index
    %c0_3 = arith.constant 0 : index
    %c0_4 = arith.constant 0 : index
    %38 = vector.load %arg3[%c0_2, %c0_3, %c0_4] : memref<1x4x256xi8, #tpu.memory_space<vmem>>, vector<1x4x256xi8>
    %39 = vector.shape_cast %38 : vector<1x4x256xi8> to vector<4x256xi8>
    %40 = vector.shape_cast %37 : vector<4x256xi8> to vector<1x4x256xi8>
    tpu.vector_store %arg3[%c0_2, %c0_3, %c0_4], %40 {strides = array<i32>} : memref<1x4x256xi8, #tpu.memory_space<vmem>>, vector<1x4x256xi8>,
    %cst_5 = arith.constant dense<0.000000e+00> : vector<256xf32>
    %41 = vector.multi_reduction <add>, %36, %cst_5 [0] : vector<4x256xf32> to vector<256xf32>
    %42 = vector.shape_cast %41 : vector<256xf32> to vector<1x256xf32>
    %43 = vector.shape_cast %42 : vector<1x256xf32> to vector<1x1x1x256xf32>
    %c0_6 = arith.constant 0 : index
    %c0_7 = arith.constant 0 : index
    %c0_8 = arith.constant 0 : index
    %c0_9 = arith.constant 0 : index
    %44 = vector.load %arg4[%c0_6, %c0_7, %c0_8, %c0_9] : memref<1x1x1x256xf32, #tpu.memory_space<vmem>>, vector<1x1x1x256xf32>
    tpu.vector_store %arg4[%c0_6, %c0_7, %c0_8, %c0_9], %43 {strides = array<i32>} : memref<1x1x1x256xf32, #tpu.memory_space<vmem>>, vector<1x1x1x256xf32>,
    return
  }
  func.func @transform_0(%arg0: i32, %arg1: i32) -> (i32, i32, i32) {
    %c0_i32 = arith.constant 0 : i32
    %c0_i32_0 = arith.constant 0 : i32
    return %arg0, %arg1, %c0_i32 : i32, i32, i32
  }
  func.func @transform_1(%arg0: i32, %arg1: i32) -> (i32, i32, i32) {
    %c0_i32 = arith.constant 0 : i32
    %c0_i32_0 = arith.constant 0 : i32
    return %arg0, %arg1, %c0_i32 : i32, i32, i32
  }
  func.func @transform_2(%arg0: i32, %arg1: i32) -> (i32, i32, i32, i32) {
    %c0_i32 = arith.constant 0 : i32
    %c0_i32_0 = arith.constant 0 : i32
    %c0_i32_1 = arith.constant 0 : i32
    return %arg0, %arg1, %c0_i32, %c0_i32_0 : i32, i32, i32, i32
  }
}

</mosaic_0001>

<llo_original>
// kernel: tpu_custom_call.1
$region0: #{tpu_custom_call.1}
  #allocation0 [shape = 'u32[]', space=smem, size = 0x4, offset = 0x4, fixed_abs, tag = 'smem constant byte address 0x4 - core index']
  #allocation1 [shape = 'u32[144,128]{1,0:T(1,128)}', space=vmem, size = 0x12000, scoped, tag = 'internal scratch']
  %s0 = inlined_call_operand.hbm [shape: s8[2,4,256], index: 0, kind: input, shape index: {}]
  %s1 = inlined_call_operand.hbm [shape: s8[2,4,256], index: 1, kind: output, shape index: {0}]
  %s2 = inlined_call_operand.hbm [shape: f32[2,1,1,256], index: 2, kind: output, shape index: {1}]
  %3 = xla_tuple %s1, %s2
  %s4 = sld [smem:[#allocation0]]
  $region49: #{tpu_custom_call.1} parent=0
    _
  %s6 = ssub.s32 1, %s4
  %s7 = scalar_select 0, %s6, %s4
  $region1: #{tpu_custom_call.1} parent=0
    #allocation2 [shape = 'u8[2048]{0}', space=vmem, size = 0x800, scoped, tag = 'input window, operand 0']
    #allocation3 [shape = 's32[2]{0}', space=sflag, size = 0x8, scoped, tag = 'scoped memory for tpu_custom_call.1']
    #allocation4 [shape = 's32[2]{0}', space=sflag, size = 0x8, scoped, tag = 'scoped memory for tpu_custom_call.1']
    #allocation5 [shape = 'u8[2048]{0}', space=vmem, size = 0x800, scoped, tag = 'output window, operand 0']
    #allocation6 [shape = 'u8[2048]{0}', space=vmem, size = 0x800, scoped, tag = 'output window, operand 1']
    #allocation7 [shape = 's32[2]{0}', space=sflag, size = 0x8, scoped, tag = 'scoped memory for tpu_custom_call.1']
    %8 = vsyncpa [#allocation3], 0
    %s9 = scalar_lea.sflag [#allocation3], 1
    %10 = vsyncpa %s9, 0
    %11 = vsyncpa [#allocation4], 0
    %s12 = scalar_lea.sflag [#allocation4], 1
    %13 = vsyncpa %s12, 0
    %14 = vsyncpa [#allocation7], 0
    %s15 = scalar_lea.sflag [#allocation7], 1
    %16 = vsyncpa %s15, 0
    loop: start=0, step=1, limit=4
    $region2: #{tpu_custom_call.1} parent=1 // loop_pre_header
      _
    $region3: #{tpu_custom_call.1} parent=1 // loop_header
      %s18 = sphi 0, %s22
      %p19 = scmp.ge.s32.totalorder %s18, 4
      %s25 = sphi 0, %s37
      %s26 = sphi 0, %s33
      %s27 = sphi 0, %s25
      %s28 = sphi 0, %s26
      %s29 = sphi 0, %s27
      %s30 = sphi 0, %s28
      %s42 = sphi 0, %s44
      %s45 = sphi 0, %s42
      %s46 = sphi 0, %s45
      %s62 = sphi 0, %s46
      %s70 = sphi 0, %s72
      %s73 = sphi 0, %s70
      %s74 = sphi 0, %s73
      %s90 = sphi 0, %s74
      %s98 = sphi 0, %s100
      %s101 = sphi 0, %s98
      %s102 = sphi 0, %s101
      %s118 = sphi 0, %s102
    $region4: #{tpu_custom_call.1} parent=1 // loop_header_branch
      %21 = sbr.rel (%p19) target = $region8
    $region5: #{tpu_custom_call.1} parent=1 // loop_body
      %s23 = ssub.s32 %s18, 1
      %s24 = ssub.s32 %s18, 2
      %s31 = sadd.s32 1, %s26
      %p32 = scmp.ge.s32.totalorder %s31, 1
      %s33 = scalar_select %p32, 0, %s31
      %s34 = sadd.s32 1, %s25
      %s35 = scalar_select %p32, %s34, %s25
      %p36 = scmp.ge.s32.totalorder %s35, 2
      %s37 = scalar_select %p36, 0, %s35
      %s38 = ssub.s32 %s25, %s37
      %s39 = ssub.s32 %s26, %s33
      %s40 = sor.u32 %s38, %s39
      %p41 = scmp.eq.s32.totalorder %s40, 0
      %s43 = sadd.s32 %s42, 1
      %s44 = scalar_select %p41, %s42, %s43
      %p47 = pneg %p41
      %p48 = scmp.eq.s32.totalorder %s18, 1
      %p49 = por %p47, %p48
      %p50 = scmp.ne.s32.totalorder %s42, %s45
      %p51 = scmp.eq.s32.totalorder %s18, 0
      %p52 = por %p50, %p51
      %p53 = scmp.ne.s32.totalorder %s42, %s45
      %p54 = scmp.eq.s32.totalorder %s23, 1
      %p55 = por %p53, %p54
      %p56 = scmp.ne.s32.totalorder %s45, %s46
      %p57 = scmp.eq.s32.totalorder %s23, 0
      %p58 = por %p56, %p57
      %p59 = scmp.ne.s32.totalorder %s45, %s46
      %p60 = scmp.eq.s32.totalorder %s24, 1
      %p61 = por %p59, %p60
      %p63 = scmp.ne.s32.totalorder %s46, %s62
      %p64 = scmp.eq.s32.totalorder %s24, 0
      %p65 = por %p63, %p64
      %s66 = ssub.s32 %s25, %s37
      %s67 = ssub.s32 %s26, %s33
      %s68 = sor.u32 %s66, %s67
      %p69 = scmp.eq.s32.totalorder %s68, 0
      %s71 = sadd.s32 %s70, 1
      %s72 = scalar_select %p69, %s70, %s71
      %p75 = pneg %p69
      %p76 = scmp.eq.s32.totalorder %s18, 1
      %p77 = por %p75, %p76
      %p78 = scmp.ne.s32.totalorder %s70, %s73
      %p79 = scmp.eq.s32.totalorder %s18, 0
      %p80 = por %p78, %p79
      %p81 = scmp.ne.s32.totalorder %s70, %s73
      %p82 = scmp.eq.s32.totalorder %s23, 1
      %p83 = por %p81, %p82
      %p84 = scmp.ne.s32.totalorder %s73, %s74
      %p85 = scmp.eq.s32.totalorder %s23, 0
      %p86 = por %p84, %p85
      %p87 = scmp.ne.s32.totalorder %s73, %s74
      %p88 = scmp.eq.s32.totalorder %s24, 1
      %p89 = por %p87, %p88
      %p91 = scmp.ne.s32.totalorder %s74, %s90
      %p92 = scmp.eq.s32.totalorder %s24, 0
      %p93 = por %p91, %p92
      %s94 = ssub.s32 %s25, %s37
      %s95 = ssub.s32 %s26, %s33
      %s96 = sor.u32 %s94, %s95
      %p97 = scmp.eq.s32.totalorder %s96, 0
      %s99 = sadd.s32 %s98, 1
      %s100 = scalar_select %p97, %s98, %s99
      %p103 = pneg %p97
      %p104 = scmp.eq.s32.totalorder %s18, 1
      %p105 = por %p103, %p104
      %p106 = scmp.ne.s32.totalorder %s98, %s101
      %p107 = scmp.eq.s32.totalorder %s18, 0
      %p108 = por %p106, %p107
      %p109 = scmp.ne.s32.totalorder %s98, %s101
      %p110 = scmp.eq.s32.totalorder %s23, 1
      %p111 = por %p109, %p110
      %p112 = scmp.ne.s32.totalorder %s101, %s102
      %p113 = scmp.eq.s32.totalorder %s23, 0
      %p114 = por %p112, %p113
      %p115 = scmp.ne.s32.totalorder %s101, %s102
      %p116 = scmp.eq.s32.totalorder %s24, 1
      %p117 = por %p115, %p116
      %p119 = scmp.ne.s32.totalorder %s102, %s118
      %p120 = scmp.eq.s32.totalorder %s24, 0
      %p121 = por %p119, %p120
      %p122 = scmp.le.s32.totalorder 1, %s18
      %p123 = scmp.lt.s32.totalorder %s18, 3
      %p124 = pnand %p122, %p123
      %p125 = pneg %p124
      // Predicated region
      $region9: #{tpu_custom_call.1} parent=5 // pred_check
        _
      $region10: #{tpu_custom_call.1} parent=5 // pred_check_branch
        %127 = sbr.rel (%p124) target = $region12
      $region11: #{tpu_custom_call.1} parent=5 // pred_region
        %s128 = ssub.s32 %s18, 1
      $region12: #{tpu_custom_call.1} parent=5 // pred_fallthru
        _
      %p129 = scmp.lt.s32.totalorder %s18, 2
      // Predicated region
      $region13: #{tpu_custom_call.1} parent=5 // pred_check
        %p130 = pneg %p129
      $region14: #{tpu_custom_call.1} parent=5 // pred_check_branch
        %132 = sbr.rel (%p130) target = $region16
      $region15: #{tpu_custom_call.1} parent=5 // pred_region
        // Predicated region
        $region17: #{tpu_custom_call.1} parent=15 // pred_check
          %p133 = pneg %p52
        $region18: #{tpu_custom_call.1} parent=15 // pred_check_branch
          %135 = sbr.rel (%p133) target = $region20
        $region19: #{tpu_custom_call.1} parent=15 // pred_region
          %s136 = sand.u32 %s42, 1
          %s137 = scalar_lea.sflag [#allocation3], %s136
          %s138 = sand.u32 %s42, 1
          %s139 = smul.addr %s138, 2
          %s140 = scalar_lea.vmem [#allocation2], %s139
          %s142 = ssub.s32 32, 32
          %143 = vsyncadd %s137, %s142
          %s144 = smul.addr %s26, 2
          %s145 = smul.addr %s25, 2
          %s146 = sadd.s32 %s144, %s145
          %s147 = smul.addr %s146, 16
          %s148 = scalar_lea.hbm %s0, %s147
          %s150 = sshll.u32 %s140, 4
          %s151 = int_to_ptr.vmem [resolvable:$true] %s150
          %153 = dma.hbm_to_vmem [thread:$0]  %s148, 32, %s151, %s137
        $region20: #{tpu_custom_call.1} parent=15 // pred_fallthru
          _
      $region16: #{tpu_custom_call.1} parent=5 // pred_fallthru
        _
      %p154 = scmp.le.s32.totalorder 1, %s18
      %p155 = scmp.lt.s32.totalorder %s18, 3
      %p156 = pnand %p154, %p155
      %p157 = pneg %p156
      // Predicated region
      $region21: #{tpu_custom_call.1} parent=5 // pred_check
        _
      $region22: #{tpu_custom_call.1} parent=5 // pred_check_branch
        %159 = sbr.rel (%p156) target = $region24
      $region23: #{tpu_custom_call.1} parent=5 // pred_region
        %s160 = ssub.s32 %s18, 1
        %s161 = sand.u32 %s45, 1
        %s162 = scalar_lea.sflag [#allocation3], %s161
        %s163 = sand.u32 %s45, 1
        %s164 = smul.addr %s163, 2
        %s165 = scalar_lea.vmem [#allocation2], %s164
        // Predicated region
        $region25: #{tpu_custom_call.1} parent=23 // pred_check
          %p166 = pneg %p58
        $region26: #{tpu_custom_call.1} parent=23 // pred_check_branch
          %168 = sbr.rel (%p166) target = $region28
        $region27: #{tpu_custom_call.1} parent=23 // pred_region
          %169 = dma.done %s162, 32
        $region28: #{tpu_custom_call.1} parent=23 // pred_fallthru
          _
        %s170 = sand.u32 %s45, 1
        %s171 = scalar_lea.sflag [#allocation3], %s170
        %s172 = sand.u32 %s45, 1
        %s173 = smul.addr %s172, 2
        %s174 = scalar_lea.vmem [#allocation2], %s173
        %p175 = pneg %p58
        %p176 = pneg %p55
        %p177 = pneg %p86
        %p178 = pneg %p83
        %s179 = sand.u32 %s73, 1
        %s180 = scalar_lea.sflag [#allocation4], %s179
        %s181 = sand.u32 %s73, 1
        %s182 = smul.addr %s181, 2
        %s183 = scalar_lea.vmem [#allocation5], %s182
        %p184 = pneg %p114
        %p185 = pneg %p111
        %s186 = sand.u32 %s101, 1
        %s187 = scalar_lea.sflag [#allocation7], %s186
        %s188 = sand.u32 %s101, 1
        %s189 = smul.addr %s188, 2
        %s190 = scalar_lea.vmem [#allocation6], %s189
        %v191 = vld [vmem:[%s165] sm:$0x3]
        %v192 = vunpack.c.0.s8 %v191
        %v193 = vcvt.s32.f32 %v192
        %v195 = vcombine.high %v193, %v193
        %196 = vrot.lane.b32.xlu0 %v195, 1
        %v197 = vpop.permute.xlu0 %196
        %199 = vrot.lane.b32.xlu0 %v193, 1
        %v200 = vpop.permute.xlu0 %199
        %vm201 = vcmask 7168
        %v202 = vsel %vm201, %v200, %v197
        %v204 = vsel %vm201, %v197, %v200
        %v206 = vcombine.low %v204, %v202
        %v208 = vmax.f32 %v193, %v206
        %209 = vrot.lane.b32.xlu0 %v193, 127
        %v210 = vpop.permute.xlu0 %209
        %211 = vrot.lane.b32.xlu0 %v195, 127
        %v212 = vpop.permute.xlu0 %211
        %vm213 = vcmask 1039360
        %v214 = vsel %vm213, %v210, %v212
        %v217 = vsel %vm213, %v212, %v210
        %v219 = vcombine.low %v214, %v217
        %v221 = vmax.f32 %v208, %v219
        %222 = vrot.lane.b32.xlu0 %v195, 2
        %v223 = vpop.permute.xlu0 %222
        %225 = vrot.lane.b32.xlu0 %v193, 2
        %v226 = vpop.permute.xlu0 %225
        %vm227 = vcmask 15360
        %v228 = vsel %vm227, %v226, %v223
        %v230 = vsel %vm227, %v223, %v226
        %v232 = vcombine.low %v230, %v228
        %v234 = vmax.f32 %v221, %v232
        %235 = vrot.lane.b32.xlu0 %v193, 126
        %v236 = vpop.permute.xlu0 %235
        %237 = vrot.lane.b32.xlu0 %v195, 126
        %v238 = vpop.permute.xlu0 %237
        %vm239 = vcmask 1031168
        %v240 = vsel %vm239, %v236, %v238
        %v243 = vsel %vm239, %v238, %v236
        %v245 = vcombine.low %v240, %v243
        %v247 = vmax.f32 %v234, %v245
        %v249 = vcombine.high %v247, %v247
        %250 = vrot.lane.b32.xlu0 %v249, 16
        %v251 = vpop.permute.xlu0 %250
        %253 = vrot.lane.b32.xlu0 %v247, 16
        %v254 = vpop.permute.xlu0 %253
        %vm255 = vcmask 130048
        %v256 = vsel %vm255, %v254, %v251
        %v258 = vsel %vm255, %v251, %v254
        %v260 = vcombine.low %v258, %v256
        %v262 = vmax.f32 %v247, %v260
        %263 = vrot.lane.b32.xlu0 %v247, 112
        %v264 = vpop.permute.xlu0 %263
        %265 = vrot.lane.b32.xlu0 %v249, 112
        %v266 = vpop.permute.xlu0 %265
        %vm267 = vcmask 916480
        %v268 = vsel %vm267, %v264, %v266
        %v271 = vsel %vm267, %v266, %v264
        %v273 = vcombine.low %v268, %v271
        %v275 = vmax.f32 %v262, %v273
        %276 = vrot.lane.b32.xlu0 %v249, 32
        %v277 = vpop.permute.xlu0 %276
        %279 = vrot.lane.b32.xlu0 %v247, 32
        %v280 = vpop.permute.xlu0 %279
        %vm281 = vcmask 261120
        %v282 = vsel %vm281, %v280, %v277
        %v284 = vsel %vm281, %v277, %v280
        %v286 = vcombine.low %v284, %v282
        %v288 = vmax.f32 %v275, %v286
        %289 = vrot.lane.b32.xlu0 %v247, 96
        %v290 = vpop.permute.xlu0 %289
        %291 = vrot.lane.b32.xlu0 %v249, 96
        %v292 = vpop.permute.xlu0 %291
        %vm293 = vcmask 785408
        %v294 = vsel %vm293, %v290, %v292
        %v297 = vsel %vm293, %v292, %v290
        %v299 = vcombine.low %v294, %v297
        %v301 = vmax.f32 %v288, %v299
        %v302 = vsub.f32 1.0, %v301
        %v304 = vcombine.high %v302, %v302
        %v306 = vtrunc.f32 %v302
        %v307 = vtrunc.f32 %v304
        %v308 = vpack.c.f32.eXmY %v306, %v306, 312
        %v312 = vpack.c.b8 %v308, %v308
        %v314 = vpack.c.f32.eXmY %v307, %v307, 312
        %v318 = vpack.c.b8 %v314, %v314
        %v320 = vcombine.low %v312, %v318
        %v322 = vunpack.c.l.s4 1966171168
        %v323 = vunpack.c.0.s8 %v322
        %v324 = vlaneseq
        %v325 = vshrl.u32 %v324, 7
        %v326 = vsub.s32 %v323, %v325
        %v327 = vrot.slane %v320, %v326
        %v329 = vunpack.c.l.s4 1966171168
        %v330 = vunpack.c.0.s8 %v329
        %v331 = vlaneseq
        %v332 = vshrl.u32 %v331, 7
        %v333 = vsub.s32 %v330, %v332
        %v334 = vrot.slane %v327, %v333
        %335 = vst [vmem:[%s183] sm:$0x3] %v334
        %vm336 = vcmask 1043456
        %v337 = vsel %vm336, %v302, 0.0
        %v338 = vrot.slane %v337, 4
        %v339 = vadd.f32 %v337, %v338
        %v340 = vrot.slane %v339, 2
        %v341 = vadd.f32 %v339, %v340
        %v342 = vrot.slane %v341, 1
        %v343 = vadd.f32 %v341, %v342
        %v344 = vsel %vm336, %v304, 0.0
        %v345 = vrot.slane %v344, 4
        %v346 = vadd.f32 %v344, %v345
        %v347 = vrot.slane %v346, 2
        %v348 = vadd.f32 %v346, %v347
        %v349 = vrot.slane %v348, 1
        %v350 = vadd.f32 %v348, %v349
        %v353 = vcombine.low %v343, %v350
        %v355 = vunpack.c.l.s4 1966171168
        %v356 = vunpack.c.0.s8 %v355
        %v357 = vlaneseq
        %v358 = vshrl.u32 %v357, 7
        %v359 = vsub.s32 %v356, %v358
        %v360 = vrot.slane %v353, %v359
        %v362 = vunpack.c.l.s4 1966171168
        %v363 = vunpack.c.0.s8 %v362
        %v364 = vlaneseq
        %v365 = vshrl.u32 %v364, 7
        %v366 = vsub.s32 %v363, %v365
        %v367 = vrot.slane %v360, %v366
        %v369 = vlaneseq
        %vm370 = vcmp.ge.s32.totalorder %v369, 0
        %vm371 = vcmp.lt.s32.totalorder %v369, 256
        %vm372 = vmand %vm370, %vm371
        %373 = vst.msk [vmem:[%s190] sm:$0x3] %vm372, %v367
        %s374 = sand.u32 %s73, 1
        %s375 = scalar_lea.sflag [#allocation4], %s374
        %s376 = sand.u32 %s73, 1
        %s377 = smul.addr %s376, 2
        %s378 = scalar_lea.vmem [#allocation5], %s377
        %s379 = sand.u32 %s101, 1
        %s380 = scalar_lea.sflag [#allocation7], %s379
        %s381 = sand.u32 %s101, 1
        %s382 = smul.addr %s381, 2
        %s383 = scalar_lea.vmem [#allocation6], %s382
        // Predicated region
        $region29: #{tpu_custom_call.1} parent=23 // pred_check
          %p384 = pneg %p83
        $region30: #{tpu_custom_call.1} parent=23 // pred_check_branch
          %386 = sbr.rel (%p384) target = $region32
        $region31: #{tpu_custom_call.1} parent=23 // pred_region
          %s388 = ssub.s32 32, 32
          %389 = vsyncadd %s375, %s388
          %s390 = smul.addr %s28, 2
          %s391 = smul.addr %s27, 2
          %s392 = sadd.s32 %s390, %s391
          %s393 = smul.addr %s392, 16
          %s394 = scalar_lea.hbm %s1, %s393
          %s396 = sshll.u32 %s378, 4
          %s397 = int_to_ptr.vmem [resolvable:$true] %s396
          %399 = dma.vmem_to_hbm [thread:$0]  %s397, 32, %s394, %s375
        $region32: #{tpu_custom_call.1} parent=23 // pred_fallthru
          _
        // Predicated region
        $region33: #{tpu_custom_call.1} parent=23 // pred_check
          %p400 = pneg %p111
        $region34: #{tpu_custom_call.1} parent=23 // pred_check_branch
          %402 = sbr.rel (%p400) target = $region36
        $region35: #{tpu_custom_call.1} parent=23 // pred_region
          %s404 = ssub.s32 32, 32
          %405 = vsyncadd %s380, %s404
          %s406 = smul.addr %s28, 2
          %s407 = smul.addr %s27, 2
          %s408 = sadd.s32 %s406, %s407
          %s409 = smul.addr %s408, 16
          %s410 = scalar_lea.hbm %s2, %s409
          %s412 = sshll.u32 %s383, 4
          %s413 = int_to_ptr.vmem [resolvable:$true] %s412
          %415 = dma.vmem_to_hbm [thread:$0]  %s413, 32, %s410, %s380
        $region36: #{tpu_custom_call.1} parent=23 // pred_fallthru
          _
      $region24: #{tpu_custom_call.1} parent=5 // pred_fallthru
        _
      %p416 = scmp.le.s32.totalorder 2, %s18
      // Predicated region
      $region37: #{tpu_custom_call.1} parent=5 // pred_check
        %p417 = pneg %p416
      $region38: #{tpu_custom_call.1} parent=5 // pred_check_branch
        %419 = sbr.rel (%p417) target = $region40
      $region39: #{tpu_custom_call.1} parent=5 // pred_region
        %s420 = ssub.s32 %s18, 2
        // Predicated region
        $region41: #{tpu_custom_call.1} parent=39 // pred_check
          %p421 = pneg %p89
        $region42: #{tpu_custom_call.1} parent=39 // pred_check_branch
          %423 = sbr.rel (%p421) target = $region44
        $region43: #{tpu_custom_call.1} parent=39 // pred_region
          %s424 = sand.u32 %s74, 1
          %s425 = scalar_lea.sflag [#allocation4], %s424
          %s426 = sand.u32 %s74, 1
          %s427 = smul.addr %s426, 2
          %s428 = scalar_lea.vmem [#allocation5], %s427
          %429 = dma.done %s425, 32
        $region44: #{tpu_custom_call.1} parent=39 // pred_fallthru
          _
        // Predicated region
        $region45: #{tpu_custom_call.1} parent=39 // pred_check
          %p430 = pneg %p117
        $region46: #{tpu_custom_call.1} parent=39 // pred_check_branch
          %432 = sbr.rel (%p430) target = $region48
        $region47: #{tpu_custom_call.1} parent=39 // pred_region
          %s433 = sand.u32 %s102, 1
          %s434 = scalar_lea.sflag [#allocation7], %s433
          %s435 = sand.u32 %s102, 1
          %s436 = smul.addr %s435, 2
          %s437 = scalar_lea.vmem [#allocation6], %s436
          %438 = dma.done %s434, 32
        $region48: #{tpu_custom_call.1} parent=39 // pred_fallthru
          _
      $region40: #{tpu_custom_call.1} parent=5 // pred_fallthru
        _
    $region6: #{tpu_custom_call.1} parent=1 // loop_footer
      %s22 = sadd.s32 1, %s18
    $region7: #{tpu_custom_call.1} parent=1 // loop_footer_branch
      %17 = sbr.rel target = $region3
    $region8: #{tpu_custom_call.1} parent=1 // loop_exit
      _
    %439 = vsyncpa [#allocation3], 1
    %s440 = scalar_lea.sflag [#allocation3], 1
    %441 = vsyncpa %s440, 1
    %442 = vsyncpa [#allocation4], 1
    %s443 = scalar_lea.sflag [#allocation4], 1
    %444 = vsyncpa %s443, 1
    %445 = vsyncpa [#allocation7], 1
    %s446 = scalar_lea.sflag [#allocation7], 1
    %447 = vsyncpa %s446, 1

</llo_original>
